<compile_context>
chip_gen: v6e
topology: v6e:2x2x1
jax: 0.10.0
libtpu: 0.0.40
codegen_flags: <defaults>
</compile_context>

<pallas_src>
import functools

import jax
import jax.numpy as jnp
from jax.experimental import pallas as pl
from jax.experimental.pallas import tpu as pltpu


_LEAKY_SLOPE = 0.01                 # PyTorch F.leaky_relu default
_VMEM_BUDGET = 24 * 1024 * 1024     # target per-step working set
_VMEM_LIMIT = 32 * 1024 * 1024      # scoped VMEM limit handed to Mosaic


def _round_up(v, m):
    return ((v + m - 1) // m) * m


def _all_encoder_kernel(x_ref, w1_ref, b1_ref, w2_ref, b2_ref, o_ref, h_ref,
                        *, pack, d_in, hidden):
    """One batch tile.

    x_ref  : (tbp, pack*d_in)      `pack` original rows folded per kernel row
    w1_ref : (d_in, hidden)        dense W1 (no kron -> no 4x MXU inflation)
    b1_ref : (1, hidden)
    w2_ref : (pack*hidden, pack*z) kron(I_pack, W2): keeps the output 128 lanes
    b2_ref : (1, pack*z)
    o_ref  : (tbp, pack*z)         lane-dense (128-wide) unmasked stores
    h_ref  : (tbp, pack*hidden)    f32 VMEM scratch for hidden activations
    """
    w1 = w1_ref[...]
    b1 = b1_ref[...]
    for k in range(pack):                      # static unroll over packed slots
        h = jnp.dot(x_ref[:, k * d_in:(k + 1) * d_in], w1,
                    preferred_element_type=jnp.float32) + b1
        h_ref[:, k * hidden:(k + 1) * hidden] = jnp.where(h > 0, h, _LEAKY_SLOPE * h)
    z = jnp.dot(h_ref[...], w2_ref[...], preferred_element_type=jnp.float32)
    o_ref[...] = (z + b2_ref[...]).astype(o_ref.dtype)


def pack_encoder_params(w1, b1, w2, b2):
    """Build kernel-ready parameters ONCE (hoisted out of the forward path).

    w1: (d_in, hidden), b1: (hidden,), w2: (hidden, z_dim), b2: (z_dim,)
    """
    d_in, hidden = int(w1.shape[0]), int(w1.shape[1])
    z_dim = int(w2.shape[1])
    # Fold `pack` batch rows per kernel row so the output tile is pack*z_dim
    # = 128 lanes wide (unmasked vector stores / dense HBM writeback).
    pack = 128 // z_dim if (z_dim < 128 and 128 % z_dim == 0) else 1
    eye = jnp.eye(pack, dtype=jnp.float32)
    return dict(
        w1=w1.astype(jnp.float32),
        b1=b1.reshape(1, hidden).astype(jnp.float32),
        w2p=jnp.kron(eye, w2.astype(jnp.float32)),            # (pack*H, pack*Z)
        b2p=jnp.tile(b2.reshape(1, z_dim).astype(jnp.float32), (1, pack)),
        pack=pack, d_in=d_in, hidden=hidden, z_dim=z_dim,
    )


def _vmem_footprint_bytes(tbp, pack, d_in, hidden, z_dim, x_itemsize):
    lane = lambda n: _round_up(n, 128)
    sub = lambda n: _round_up(max(n, 1), 8)
    x_b = tbp * lane(pack * d_in) * x_itemsize
    o_b = tbp * lane(pack * z_dim) * 4
    h_b = tbp * lane(pack * hidden) * 4
    w_b = (sub(d_in) * lane(hidden) * x_itemsize
           + sub(pack * hidden) * lane(pack * z_dim) * 4
           + sub(1) * lane(hidden) * 4 + sub(1) * lane(pack * z_dim) * 4)
    # x / out / weights are double-buffered by the Pallas pipeline; h is scratch.
    return 2 * (x_b + o_b + w_b) + h_b


def all_encoder_forward(traj_feats, params, *, block_rows=8192,
                        compute_dtype=jnp.float32):
    """traj_feats: (B, num_steps, wpt_dim) or (B, num_steps*wpt_dim).

    params: output of pack_encoder_params().
    block_rows: target ORIGINAL batch rows per grid step (review: 4096-8192).
    compute_dtype: jnp.float32 (default, matches reference to 1e-5) or
      jnp.bfloat16 to halve the dominant x HBM stream at reduced precision.
    """
    pack, d_in = params["pack"], params["d_in"]
    hidden, z_dim = params["hidden"], params["z_dim"]

    B = traj_feats.shape[0]
    x = traj_feats.reshape(B, -1)                      # row-major, == torch .view
    assert x.shape[1] == d_in, "feature dim mismatch"

    # Pad only up to a multiple of `pack` (and >= 8 packed rows); the ragged
    # last grid block is clipped by Pallas, so no full-array pad to a tile
    # multiple is needed (avoids an extra read+write of all of x in HBM).
    rows_needed = max(_round_up(B, pack), 8 * pack)
    if rows_needed != B:
        x = jnp.pad(x, ((0, rows_needed - B), (0, 0)))
    bp = rows_needed // pack                           # packed kernel rows
    x_packed = x.reshape(bp, pack * d_in).astype(compute_dtype)   # free reinterpret

    w1 = params["w1"].astype(compute_dtype)
    b1, w2p, b2p = params["b1"], params["w2p"], params["b2p"]
    x_itemsize = jnp.dtype(compute_dtype).itemsize

    # Largest batch tile that fits the VMEM budget (small tiles waste ~0.35us
    # per grid step; 1024-2048 packed rows reach ~85% of the HBM roofline).
    tbp = min(max(8, _round_up(block_rows // pack, 8)), (bp // 8) * 8)
    while tbp > 8 and _vmem_footprint_bytes(tbp, pack, d_in, hidden, z_dim,
                                            x_itemsize) > _VMEM_BUDGET:
        tbp = max(8, ((tbp // 2) // 8) * 8)
    n_tiles = pl.cdiv(bp, tbp)                         # last tile may be partial

    b_eff = bp * pack
    cost = pl.CostEstimate(
        # Executed matmul work: dense W1 per slot + block-diagonal kron'd W2.
        flops=2 * b_eff * (d_in * hidden + pack * hidden * z_dim),
        transcendentals=0,
        bytes_accessed=(b_eff * d_in * x_itemsize                     # x
                        + d_in * hidden * x_itemsize                  # W1
                        + hidden * 4                                  # b1
                        + (pack * hidden) * (pack * z_dim) * 4        # kron'd W2
                        + pack * z_dim * 4                            # b2
                        + b_eff * z_dim * 4),                         # output
    )

    kernel = functools.partial(_all_encoder_kernel, pack=pack, d_in=d_in,
                               hidden=hidden)

    out_packed = pl.pallas_call(
        kernel,
        out_shape=jax.ShapeDtypeStruct((bp, pack * z_dim), jnp.float32),
        grid_spec=pltpu.PrefetchScalarGridSpec(
            num_scalar_prefetch=0,
            grid=(n_tiles,),
            in_specs=[
                pl.BlockSpec((tbp, pack * d_in), lambda i: (i, 0)),           # x tile
                pl.BlockSpec((d_in, hidden), lambda i: (0, 0)),               # W1 (resident)
                pl.BlockSpec((1, hidden), lambda i: (0, 0)),                  # b1
                pl.BlockSpec((pack * hidden, pack * z_dim), lambda i: (0, 0)),  # W2 kron (resident)
                pl.BlockSpec((1, pack * z_dim), lambda i: (0, 0)),            # b2 tiled
            ],
            out_specs=pl.BlockSpec((tbp, pack * z_dim), lambda i: (i, 0)),
            scratch_shapes=[pltpu.VMEM((tbp, pack * hidden), jnp.float32)],
        ),
        # TODO(synk): use pltpu.CORE_PARALLEL on v7x for true dual-TensorCore
        # splitting of the batch axis; "parallel" is kept for portability.
        compiler_params=pltpu.CompilerParams(
            dimension_semantics=("parallel",),
            vmem_limit_bytes=_VMEM_LIMIT),
        cost_estimate=cost,
    )(x_packed, w1, b1, w2p, b2p)

    # Undo the lane packing (free row-major reinterpretation), drop padding.
    return out_packed.reshape(bp * pack, z_dim)[:B]


def init_params(key, num_steps=30, wpt_dim=6, hidden_dim=64, z_feat_dim=32):
    """Deterministic init mimicking nn.Linear's U(-1/sqrt(fan_in), 1/sqrt(fan_in)).
    Weights stored as (in_features, out_features), biases 1-D."""
    d_in = num_steps * wpt_dim
    k1, k2, k3, k4 = jax.random.split(key, 4)
    lim1 = 1.0 / jnp.sqrt(d_in)
    lim2 = 1.0 / jnp.sqrt(hidden_dim)
    w1 = jax.random.uniform(k1, (d_in, hidden_dim), jnp.float32, -lim1, lim1)
    b1 = jax.random.uniform(k2, (hidden_dim,), jnp.float32, -lim1, lim1)
    w2 = jax.random.uniform(k3, (hidden_dim, z_feat_dim), jnp.float32, -lim2, lim2)
    b2 = jax.random.uniform(k4, (z_feat_dim,), jnp.float32, -lim2, lim2)
    return w1, b1, w2, b2


def reference_forward(traj_feats, w1, b1, w2, b2):
    B = traj_feats.shape[0]
    x = traj_feats.reshape(B, -1)
    h = x @ w1 + b1
    h = jnp.where(h > 0, h, _LEAKY_SLOPE * h)
    return h @ w2 + b2


if __name__ == "__main__":
    key = jax.random.PRNGKey(0)
    k_x, k_p, k_x2 = jax.random.split(key, 3)

    num_steps, wpt_dim = 30, 6
    hidden_dim, z_feat_dim = 64, 32
    w1, b1, w2, b2 = init_params(k_p, num_steps, wpt_dim, hidden_dim, z_feat_dim)
    params = pack_encoder_params(w1, b1, w2, b2)       # once, at load time

    # Small shape matching the module (batch=2).
    batch = 2
    traj_feats = jax.random.normal(k_x, (batch, num_steps, wpt_dim), jnp.float32)
    z = jax.block_until_ready(all_encoder_forward(traj_feats, params))
    z_ref = reference_forward(traj_feats, w1, b1, w2, b2)
    assert z.shape == (batch, z_feat_dim)
    assert jnp.allclose(z, z_ref, atol=1e-5, rtol=1e-5), "mismatch vs reference (B=2)"

    # Multi-tile grid + ragged last block (no full-array pad in the wrapper).
    batch2 = 300
    traj_feats2 = jax.random.normal(k_x2, (batch2, num_steps, wpt_dim), jnp.float32)
    z2 = jax.block_until_ready(all_encoder_forward(traj_feats2, params, block_rows=64))
    z2_ref = reference_forward(traj_feats2, w1, b1, w2, b2)
    assert z2.shape == (batch2, z_feat_dim)
    assert jnp.allclose(z2, z2_ref, atol=1e-5, rtol=1e-5), "mismatch (B=300, small tiles)"

    # Default (large-tile) config on the same data.
    z3 = jax.block_until_ready(all_encoder_forward(traj_feats2, params))
    assert jnp.allclose(z3, z2_ref, atol=1e-5, rtol=1e-5), "mismatch (B=300, default tiles)"

    # Optional bf16 streaming of x/W1 (explicit accuracy/perf trade-off).
    z4 = jax.block_until_ready(
        all_encoder_forward(traj_feats2, params, compute_dtype=jnp.bfloat16))
    assert jnp.allclose(z4, z2_ref, atol=2e-2, rtol=2e-2), "mismatch (B=300, bf16)"

    print("KERNEL_OK")
</pallas_src>

<mosaic_0001>
module attributes {stable_mosaic.version = 11 : i64} {
  func.func @_all_encoder_kernel(%arg0: i32, %arg1: memref<8x720xf32, #tpu.memory_space<vmem>>, %arg2: memref<180x64xf32, #tpu.memory_space<vmem>>, %arg3: memref<1x64xf32, #tpu.memory_space<vmem>>, %arg4: memref<256x128xf32, #tpu.memory_space<vmem>>, %arg5: memref<1x128xf32, #tpu.memory_space<vmem>>, %arg6: memref<8x128xf32, #tpu.memory_space<vmem>>, %arg7: memref<8x256xf32, #tpu.memory_space<vmem>>) attributes {dimension_semantics = [#tpu.dimension_semantics<parallel>], iteration_bounds = array<i64: 1>, scalar_prefetch = 0 : i64, scratch_operands = 1 : i64, tpu.core_type = #tpu.core_type<tc>, window_params = [{transform_indices = @transform_0, window_bounds = array<i64: 8, 720>}, {pipeline_mode = #tpu.pipeline_mode<synchronous>, transform_indices = @transform_1, window_bounds = array<i64: 180, 64>}, {pipeline_mode = #tpu.pipeline_mode<synchronous>, transform_indices = @transform_2, window_bounds = array<i64: 1, 64>}, {pipeline_mode = #tpu.pipeline_mode<synchronous>, transform_indices = @transform_3, window_bounds = array<i64: 256, 128>}, {pipeline_mode = #tpu.pipeline_mode<synchronous>, transform_indices = @transform_4, window_bounds = array<i64: 1, 128>}, {transform_indices = @transform_5, window_bounds = array<i64: 8, 128>}]} {
    %c0 = arith.constant 0 : index
    %c0_0 = arith.constant 0 : index
    %0 = vector.load %arg2[%c0, %c0_0] : memref<180x64xf32, #tpu.memory_space<vmem>>, vector<180x64xf32>
    %c0_1 = arith.constant 0 : index
    %c0_2 = arith.constant 0 : index
    %1 = vector.load %arg3[%c0_1, %c0_2] : memref<1x64xf32, #tpu.memory_space<vmem>>, vector<1x64xf32>
    %c0_3 = arith.constant 0 : index
    %c0_4 = arith.constant 0 : index
    %2 = vector.load %arg1[%c0_3, %c0_4] : memref<8x720xf32, #tpu.memory_space<vmem>>, vector<8x180xf32>
    %cst = arith.constant dense<0.000000e+00> : vector<8x64xf32>
    %3 = tpu.matmul %2, %0, %cst {dimension_numbers = #tpu.dot_dimension_numbers<[1], [0], [0], [1], [0, 0, 1, 1], [], []>} : vector<8x180xf32>, vector<180x64xf32>, vector<8x64xf32> -> vector<8x64xf32>
    %4 = vector.broadcast %1 : vector<1x64xf32> to vector<8x64xf32>
    %5 = arith.addf %3, %4 : vector<8x64xf32>
    %cst_5 = arith.constant 0.000000e+00 : f32
    %6 = vector.broadcast %cst_5 : f32 to vector<8x64xf32>
    %7 = arith.cmpf ogt, %5, %6 : vector<8x64xf32>
    %cst_6 = arith.constant 0.00999999977 : f32
    %8 = vector.broadcast %cst_6 : f32 to vector<8x64xf32>
    %9 = arith.mulf %8, %5 : vector<8x64xf32>
    %10 = arith.select %7, %5, %9 : vector<8x64xi1>, vector<8x64xf32>
    %c0_7 = arith.constant 0 : index
    %c0_8 = arith.constant 0 : index
    %11 = vector.load %arg7[%c0_7, %c0_8] : memref<8x256xf32, #tpu.memory_space<vmem>>, vector<8x64xf32>
    tpu.vector_store %arg7[%c0_7, %c0_8], %10 {strides = array<i32>} : memref<8x256xf32, #tpu.memory_space<vmem>>, vector<8x64xf32>,
    %c0_9 = arith.constant 0 : index
    %c180 = arith.constant 180 : index
    %12 = vector.load %arg1[%c0_9, %c180] : memref<8x720xf32, #tpu.memory_space<vmem>>, vector<8x180xf32>
    %cst_10 = arith.constant dense<0.000000e+00> : vector<8x64xf32>
    %13 = tpu.matmul %12, %0, %cst_10 {dimension_numbers = #tpu.dot_dimension_numbers<[1], [0], [0], [1], [0, 0, 1, 1], [], []>} : vector<8x180xf32>, vector<180x64xf32>, vector<8x64xf32> -> vector<8x64xf32>
    %14 = vector.broadcast %1 : vector<1x64xf32> to vector<8x64xf32>
    %15 = arith.addf %13, %14 : vector<8x64xf32>
    %cst_11 = arith.constant 0.000000e+00 : f32
    %16 = vector.broadcast %cst_11 : f32 to vector<8x64xf32>
    %17 = arith.cmpf ogt, %15, %16 : vector<8x64xf32>
    %cst_12 = arith.constant 0.00999999977 : f32
    %18 = vector.broadcast %cst_12 : f32 to vector<8x64xf32>
    %19 = arith.mulf %18, %15 : vector<8x64xf32>
    %20 = arith.select %17, %15, %19 : vector<8x64xi1>, vector<8x64xf32>
    %c0_13 = arith.constant 0 : index
    %c64 = arith.constant 64 : index
    %21 = vector.load %arg7[%c0_13, %c64] : memref<8x256xf32, #tpu.memory_space<vmem>>, vector<8x64xf32>
    tpu.vector_store %arg7[%c0_13, %c64], %20 {strides = array<i32>} : memref<8x256xf32, #tpu.memory_space<vmem>>, vector<8x64xf32>,
    %c0_14 = arith.constant 0 : index
    %c360 = arith.constant 360 : index
    %22 = vector.load %arg1[%c0_14, %c360] : memref<8x720xf32, #tpu.memory_space<vmem>>, vector<8x180xf32>
    %cst_15 = arith.constant dense<0.000000e+00> : vector<8x64xf32>
    %23 = tpu.matmul %22, %0, %cst_15 {dimension_numbers = #tpu.dot_dimension_numbers<[1], [0], [0], [1], [0, 0, 1, 1], [], []>} : vector<8x180xf32>, vector<180x64xf32>, vector<8x64xf32> -> vector<8x64xf32>
    %24 = vector.broadcast %1 : vector<1x64xf32> to vector<8x64xf32>
    %25 = arith.addf %23, %24 : vector<8x64xf32>
    %cst_16 = arith.constant 0.000000e+00 : f32
    %26 = vector.broadcast %cst_16 : f32 to vector<8x64xf32>
    %27 = arith.cmpf ogt, %25, %26 : vector<8x64xf32>
    %cst_17 = arith.constant 0.00999999977 : f32
    %28 = vector.broadcast %cst_17 : f32 to vector<8x64xf32>
    %29 = arith.mulf %28, %25 : vector<8x64xf32>
    %30 = arith.select %27, %25, %29 : vector<8x64xi1>, vector<8x64xf32>
    %c0_18 = arith.constant 0 : index
    %c128 = arith.constant 128 : index
    %31 = vector.load %arg7[%c0_18, %c128] : memref<8x256xf32, #tpu.memory_space<vmem>>, vector<8x64xf32>
    tpu.vector_store %arg7[%c0_18, %c128], %30 {strides = array<i32>} : memref<8x256xf32, #tpu.memory_space<vmem>>, vector<8x64xf32>,
    %c0_19 = arith.constant 0 : index
    %c540 = arith.constant 540 : index
    %32 = vector.load %arg1[%c0_19, %c540] : memref<8x720xf32, #tpu.memory_space<vmem>>, vector<8x180xf32>
    %cst_20 = arith.constant dense<0.000000e+00> : vector<8x64xf32>
    %33 = tpu.matmul %32, %0, %cst_20 {dimension_numbers = #tpu.dot_dimension_numbers<[1], [0], [0], [1], [0, 0, 1, 1], [], []>} : vector<8x180xf32>, vector<180x64xf32>, vector<8x64xf32> -> vector<8x64xf32>
    %34 = vector.broadcast %1 : vector<1x64xf32> to vector<8x64xf32>
    %35 = arith.addf %33, %34 : vector<8x64xf32>
    %cst_21 = arith.constant 0.000000e+00 : f32
    %36 = vector.broadcast %cst_21 : f32 to vector<8x64xf32>
    %37 = arith.cmpf ogt, %35, %36 : vector<8x64xf32>
    %cst_22 = arith.constant 0.00999999977 : f32
    %38 = vector.broadcast %cst_22 : f32 to vector<8x64xf32>
    %39 = arith.mulf %38, %35 : vector<8x64xf32>
    %40 = arith.select %37, %35, %39 : vector<8x64xi1>, vector<8x64xf32>
    %c0_23 = arith.constant 0 : index
    %c192 = arith.constant 192 : index
    %41 = vector.load %arg7[%c0_23, %c192] : memref<8x256xf32, #tpu.memory_space<vmem>>, vector<8x64xf32>
    tpu.vector_store %arg7[%c0_23, %c192], %40 {strides = array<i32>} : memref<8x256xf32, #tpu.memory_space<vmem>>, vector<8x64xf32>,
    %c0_24 = arith.constant 0 : index
    %c0_25 = arith.constant 0 : index
    %42 = vector.load %arg7[%c0_24, %c0_25] : memref<8x256xf32, #tpu.memory_space<vmem>>, vector<8x256xf32>
    %c0_26 = arith.constant 0 : index
    %c0_27 = arith.constant 0 : index
    %43 = vector.load %arg4[%c0_26, %c0_27] : memref<256x128xf32, #tpu.memory_space<vmem>>, vector<256x128xf32>
    %cst_28 = arith.constant dense<0.000000e+00> : vector<8x128xf32>
    %44 = tpu.matmul %42, %43, %cst_28 {dimension_numbers = #tpu.dot_dimension_numbers<[1], [0], [0], [1], [0, 0, 1, 1], [], []>} : vector<8x256xf32>, vector<256x128xf32>, vector<8x128xf32> -> vector<8x128xf32>
    %c0_29 = arith.constant 0 : index
    %c0_30 = arith.constant 0 : index
    %45 = vector.load %arg5[%c0_29, %c0_30] : memref<1x128xf32, #tpu.memory_space<vmem>>, vector<1x128xf32>
    %46 = vector.broadcast %45 : vector<1x128xf32> to vector<8x128xf32>
    %47 = arith.addf %44, %46 : vector<8x128xf32>
    %c0_31 = arith.constant 0 : index
    %c0_32 = arith.constant 0 : index
    %48 = vector.load %arg6[%c0_31, %c0_32] : memref<8x128xf32, #tpu.memory_space<vmem>>, vector<8x128xf32>
    tpu.vector_store %arg6[%c0_31, %c0_32], %47 {strides = array<i32>} : memref<8x128xf32, #tpu.memory_space<vmem>>, vector<8x128xf32>,
    return
  }
  func.func @transform_0(%arg0: i32) -> (i32, i32) {
    %c0_i32 = arith.constant 0 : i32
    %c0_i32_0 = arith.constant 0 : i32
    return %arg0, %c0_i32 : i32, i32
  }
  func.func @transform_1(%arg0: i32) -> (i32, i32) {
    %c0_i32 = arith.constant 0 : i32
    %c0_i32_0 = arith.constant 0 : i32
    %c0_i32_1 = arith.constant 0 : i32
    return %c0_i32, %c0_i32_0 : i32, i32
  }
  func.func @transform_2(%arg0: i32) -> (i32, i32) {
    %c0_i32 = arith.constant 0 : i32
    %c0_i32_0 = arith.constant 0 : i32
    %c0_i32_1 = arith.constant 0 : i32
    return %c0_i32, %c0_i32_0 : i32, i32
  }
  func.func @transform_3(%arg0: i32) -> (i32, i32) {
    %c0_i32 = arith.constant 0 : i32
    %c0_i32_0 = arith.constant 0 : i32
    %c0_i32_1 = arith.constant 0 : i32
    return %c0_i32, %c0_i32_0 : i32, i32
  }
  func.func @transform_4(%arg0: i32) -> (i32, i32) {
    %c0_i32 = arith.constant 0 : i32
    %c0_i32_0 = arith.constant 0 : i32
    %c0_i32_1 = arith.constant 0 : i32
    return %c0_i32, %c0_i32_0 : i32, i32
  }
  func.func @transform_5(%arg0: i32) -> (i32, i32) {
    %c0_i32 = arith.constant 0 : i32
    %c0_i32_0 = arith.constant 0 : i32
    return %arg0, %c0_i32 : i32, i32
  }
}

</mosaic_0001>

<llo_original>
// kernel: tpu_custom_call.1
$region0: #{tpu_custom_call.1}
  #allocation0 [shape = 'u32[]', space=smem, size = 0x4, offset = 0x4, fixed_abs, tag = 'smem constant byte address 0x4 - core index']
  #allocation1 [shape = 'u32[144,128]{1,0:T(1,128)}', space=vmem, size = 0x12000, scoped, tag = 'internal scratch']
  #allocation2 [shape = 'f32[8,256]{1,0:T(8,128)}', space=vmem, size = 0x2000, scoped, tag = 'scratch operand']
  %s0 = inlined_call_operand.vmem [shape: f32[8,720], index: 0, kind: input, shape index: {}]
  %s1 = inlined_call_operand.vmem [shape: f32[180,64], index: 1, kind: input, shape index: {}]
  %s2 = inlined_call_operand.vmem [shape: f32[1,64], index: 2, kind: input, shape index: {}]
  %s3 = inlined_call_operand.vmem [shape: f32[256,128], index: 3, kind: input, shape index: {}]
  %s4 = inlined_call_operand.vmem [shape: f32[1,128], index: 4, kind: input, shape index: {}]
  %s5 = inlined_call_operand.hbm [shape: f32[8,128], index: 5, kind: output, shape index: {}]
  %s6 = sld [smem:[#allocation0]]
  $region30: #{tpu_custom_call.1} parent=0
    _
  %s8 = ssub.s32 1, %s6
  %s9 = scalar_select 0, %s8, %s6
  $region1: #{tpu_custom_call.1} parent=0
    #allocation3 [shape = 'u8[4096]{0}', space=vmem, size = 0x1000, scoped, tag = 'output window, operand 0, single buffered']
    #allocation4 [shape = 's32[1]{0}', space=sflag, size = 0x4, scoped, tag = 'scoped memory for tpu_custom_call.1']
    %10 = vsyncpa [#allocation4], 0
    // Predicated region
    $region2: #{tpu_custom_call.1} parent=1 // pred_check
      _
    $region3: #{tpu_custom_call.1} parent=1 // pred_check_branch
      %12 = sbr.rel (0) target = $region5
    $region4: #{tpu_custom_call.1} parent=1 // pred_region
      _
    $region5: #{tpu_custom_call.1} parent=1 // pred_fallthru
      _
    // Predicated region
    $region6: #{tpu_custom_call.1} parent=1 // pred_check
      _
    $region7: #{tpu_custom_call.1} parent=1 // pred_check_branch
      %14 = sbr.rel (0) target = $region9
    $region8: #{tpu_custom_call.1} parent=1 // pred_region
      _
    $region9: #{tpu_custom_call.1} parent=1 // pred_fallthru
      _
    // Predicated region
    $region10: #{tpu_custom_call.1} parent=1 // pred_check
      _
    $region11: #{tpu_custom_call.1} parent=1 // pred_check_branch
      %16 = sbr.rel (0) target = $region13
    $region12: #{tpu_custom_call.1} parent=1 // pred_region
      _
    $region13: #{tpu_custom_call.1} parent=1 // pred_fallthru
      _
    // Predicated region
    $region14: #{tpu_custom_call.1} parent=1 // pred_check
      _
    $region15: #{tpu_custom_call.1} parent=1 // pred_check_branch
      %18 = sbr.rel (0) target = $region17
    $region16: #{tpu_custom_call.1} parent=1 // pred_region
      _
    $region17: #{tpu_custom_call.1} parent=1 // pred_fallthru
      _
    // Predicated region
    $region18: #{tpu_custom_call.1} parent=1 // pred_check
      _
    $region19: #{tpu_custom_call.1} parent=1 // pred_check_branch
      %20 = sbr.rel (0) target = $region21
    $region20: #{tpu_custom_call.1} parent=1 // pred_region
      _
    $region21: #{tpu_custom_call.1} parent=1 // pred_fallthru
      _
    %v21 = vld [vmem:[%s1] sm:$0xff]
    %v22 = vld [vmem:[%s1 + $0x8] sm:$0xff]
    %v23 = vld [vmem:[%s1 + $0x10] sm:$0xff]
    %v24 = vld [vmem:[%s1 + $0x18] sm:$0xff]
    %v25 = vld [vmem:[%s1 + $0x20] sm:$0xff]
    %v26 = vld [vmem:[%s1 + $0x28] sm:$0xff]
    %v27 = vld [vmem:[%s1 + $0x30] sm:$0xff]
    %v28 = vld [vmem:[%s1 + $0x38] sm:$0xff]
    %v29 = vld [vmem:[%s1 + $0x40] sm:$0xff]
    %v30 = vld [vmem:[%s1 + $0x48] sm:$0xff]
    %v31 = vld [vmem:[%s1 + $0x50] sm:$0xff]
    %v32 = vld [vmem:[%s1 + $0x58] sm:$0xff]
    %v33 = vld [vmem:[%s1 + $0x60] sm:$0xff]
    %v34 = vld [vmem:[%s1 + $0x68] sm:$0xff]
    %v35 = vld [vmem:[%s1 + $0x70] sm:$0xff]
    %v36 = vld [vmem:[%s1 + $0x78] sm:$0xff]
    %v37 = vld [vmem:[%s1 + $0x80] sm:$0xff]
    %v38 = vld [vmem:[%s1 + $0x88] sm:$0xff]
    %v39 = vld [vmem:[%s1 + $0x90] sm:$0xff]
    %v40 = vld [vmem:[%s1 + $0x98] sm:$0xff]
    %v41 = vld [vmem:[%s1 + $0xa0] sm:$0xff]
    %v42 = vld [vmem:[%s1 + $0xa8] sm:$0xff]
    %v43 = vld [vmem:[%s1 + $0xb0] sm:$0xf]
    %v44 = vld [vmem:[%s2] sm:$0x1]
    %v45 = vld [vmem:[%s0] sm:$0xff]
    %v46 = vld [vmem:[%s0 + $0x8] sm:$0xff]
    %v48 = vlaneseq
    %v49 = vshrl.u32 %v48, 7
    %v50 = vsub.s32 0, %v49
    %v51 = vrot.slane %v44, %v50
    %vm53 = vcmask 424960
    %v55 = vsel %vm53, %v46, 0
    %vm57 = vcmask 1043456
    %v59 = vsel %vm57, %v43, 0
    %61 = vmatprep.subr.mxu0 0.0
    %62 = vmatpush1.msra.mxu0 %v36
    %63 = vmatprep.subr.mxu0 0.0
    %64 = vmatpush1.msra.mxu0 %v35
    %65 = vmatprep.subr.mxu0 0.0
    %66 = vmatpush1.msra.mxu0 %v34
    %67 = vmatprep.subr.mxu0 0.0
    %68 = vmatpush1.msra.mxu0 %v33
    %69 = vmatprep.subr.mxu0 0.0
    %70 = vmatpush1.msra.mxu0 %v32
    %71 = vmatprep.subr.mxu0 0.0
    %72 = vmatpush1.msra.mxu0 %v31
    %73 = vmatprep.subr.mxu0 0.0
    %74 = vmatpush1.msra.mxu0 %v30
    %75 = vmatprep.subr.mxu0 0.0
    %76 = vmatpush1.msra.mxu0 %v29
    %77 = vmatprep.subr.mxu0 0.0
    %78 = vmatpush1.msra.mxu0 %v28
    %79 = vmatprep.subr.mxu0 0.0
    %80 = vmatpush1.msra.mxu0 %v27
    %81 = vmatprep.subr.mxu0 0.0
    %82 = vmatpush1.msra.mxu0 %v26
    %83 = vmatprep.subr.mxu0 0.0
    %84 = vmatpush1.msra.mxu0 %v25
    %85 = vmatprep.subr.mxu0 0.0
    %86 = vmatpush1.msra.mxu0 %v24
    %87 = vmatprep.subr.mxu0 0.0
    %88 = vmatpush1.msra.mxu0 %v23
    %89 = vmatprep.subr.mxu0 0.0
    %90 = vmatpush1.msra.mxu0 %v22
    %91 = vmatprep.subr.mxu0 0.0
    %92 = vmatpush1.msra.mxu0 %v21
    %93 = vmatprep.subr.mxu0 0.0
    %94 = vmatpush2.msra.mxu0 0.0
    %95 = vmatprep.subr.mxu0 0.0
    %96 = vmatpush2.msra.mxu0 0.0
    %97 = vmatprep.subr.mxu0 0.0
    %98 = vmatpush2.msra.mxu0 0.0
    %99 = vmatprep.subr.mxu0 0.0
    %100 = vmatpush2.msra.mxu0 0.0
    %101 = vmatprep.subr.mxu0 0.0
    %102 = vmatpush2.msra.mxu0 0.0
    %103 = vmatprep.subr.mxu0 0.0
    %104 = vmatpush2.msra.mxu0 0.0
    %105 = vmatprep.subr.mxu0 0.0
    %106 = vmatpush2.msra.mxu0 0.0
    %107 = vmatprep.subr.mxu0 0.0
    %108 = vmatpush2.msra.mxu0 0.0
    %109 = vmatprep.subr.mxu0 0.0
    %110 = vmatpush2.msra.mxu0 0.0
    %111 = vmatprep.subr.mxu0 0.0
    %112 = vmatpush2.msra.mxu0 %v59
    %113 = vmatprep.subr.mxu0 0.0
    %114 = vmatpush2.msra.mxu0 %v42
    %115 = vmatprep.subr.mxu0 0.0
    %116 = vmatpush2.msra.mxu0 %v41
    %117 = vmatprep.subr.mxu0 0.0
    %118 = vmatpush2.msra.mxu0 %v40
    %119 = vmatprep.subr.mxu0 0.0
    %120 = vmatpush2.msra.mxu0 %v39
    %121 = vmatprep.subr.mxu0 0.0
    %122 = vmatpush2.msra.mxu0 %v38
    %123 = vmatprep.subr.mxu0 0.0
    %124 = vmatpush2.msra.mxu0 %v37
    %125 = vmatprep.mubr.f32.mxu0 %v55
    %126 = vmatmul.mubr.f32.gmra.mxu0 %v45
    %v127 = vpop.f32.mrf.mxu0
    %v128 = vadd.f32 %v51, %v127
    %v129 = vpop.f32.mrf.mxu0
    %130 = vdwg.mxu0
    %vm131 = vcmp.gt.f32.partialorder %v128, 0.0
    %v132 = vmul.f32 %v128, 0.01
    %v133 = vsel %vm131, %v128, %v132
    %vm134 = vcmask 523264
    %135 = vst.msk [vmem:[#allocation2] sm:$0xff] %vm134, %v133
    %v136 = vld [vmem:[%s0 + $0x8] sm:$0xff]
    %v137 = vld [vmem:[%s0 + $0x10] sm:$0xff]
    %140 = vrot.lane.b32.xlu0 %v136, 76
    %v141 = vpop.permute.xlu0 %140
    %142 = vrot.lane.b32.xlu0 %v137, 76
    %v143 = vpop.permute.xlu0 %142
    %vm144 = vcmask 621568
    %v145 = vsel %vm144, %v141, %v143
    %v147 = vsel %vm53, %v143, 0
    %149 = vmatprep.subr.mxu0 0.0
    %150 = vmatpush1.msra.mxu0 %v36
    %151 = vmatprep.subr.mxu0 0.0
    %152 = vmatpush1.msra.mxu0 %v35
    %153 = vmatprep.subr.mxu0 0.0
    %154 = vmatpush1.msra.mxu0 %v34
    %155 = vmatprep.subr.mxu0 0.0
    %156 = vmatpush1.msra.mxu0 %v33
    %157 = vmatprep.subr.mxu0 0.0
    %158 = vmatpush1.msra.mxu0 %v32
    %159 = vmatprep.subr.mxu0 0.0
    %160 = vmatpush1.msra.mxu0 %v31
    %161 = vmatprep.subr.mxu0 0.0
    %162 = vmatpush1.msra.mxu0 %v30
    %163 = vmatprep.subr.mxu0 0.0
    %164 = vmatpush1.msra.mxu0 %v29
    %165 = vmatprep.subr.mxu0 0.0
    %166 = vmatpush1.msra.mxu0 %v28
    %167 = vmatprep.subr.mxu0 0.0
    %168 = vmatpush1.msra.mxu0 %v27
    %169 = vmatprep.subr.mxu0 0.0
    %170 = vmatpush1.msra.mxu0 %v26
    %171 = vmatprep.subr.mxu0 0.0
    %172 = vmatpush1.msra.mxu0 %v25
    %173 = vmatprep.subr.mxu0 0.0
    %174 = vmatpush1.msra.mxu0 %v24
    %175 = vmatprep.subr.mxu0 0.0
    %176 = vmatpush1.msra.mxu0 %v23
    %177 = vmatprep.subr.mxu0 0.0
    %178 = vmatpush1.msra.mxu0 %v22
    %179 = vmatprep.subr.mxu0 0.0
    %180 = vmatpush1.msra.mxu0 %v21
    %181 = vmatprep.subr.mxu0 0.0
    %182 = vmatpush2.msra.mxu0 0.0
    %183 = vmatprep.subr.mxu0 0.0
    %184 = vmatpush2.msra.mxu0 0.0
    %185 = vmatprep.subr.mxu0 0.0
    %186 = vmatpush2.msra.mxu0 0.0
    %187 = vmatprep.subr.mxu0 0.0
    %188 = vmatpush2.msra.mxu0 0.0
    %189 = vmatprep.subr.mxu0 0.0
    %190 = vmatpush2.msra.mxu0 0.0
    %191 = vmatprep.subr.mxu0 0.0
    %192 = vmatpush2.msra.mxu0 0.0
    %193 = vmatprep.subr.mxu0 0.0
    %194 = vmatpush2.msra.mxu0 0.0
    %195 = vmatprep.subr.mxu0 0.0
    %196 = vmatpush2.msra.mxu0 0.0
    %197 = vmatprep.subr.mxu0 0.0
    %198 = vmatpush2.msra.mxu0 0.0
    %199 = vmatprep.subr.mxu0 0.0
    %200 = vmatpush2.msra.mxu0 %v59
    %201 = vmatprep.subr.mxu0 0.0
    %202 = vmatpush2.msra.mxu0 %v42
    %203 = vmatprep.subr.mxu0 0.0
    %204 = vmatpush2.msra.mxu0 %v41
    %205 = vmatprep.subr.mxu0 0.0
    %206 = vmatpush2.msra.mxu0 %v40
    %207 = vmatprep.subr.mxu0 0.0
    %208 = vmatpush2.msra.mxu0 %v39
    %209 = vmatprep.subr.mxu0 0.0
    %210 = vmatpush2.msra.mxu0 %v38
    %211 = vmatprep.subr.mxu0 0.0
    %212 = vmatpush2.msra.mxu0 %v37
    %213 = vmatprep.mubr.f32.mxu0 %v147
    %214 = vmatmul.mubr.f32.gmra.mxu0 %v145
    %v215 = vpop.f32.mrf.mxu0
    %v216 = vadd.f32 %v51, %v215
    %v217 = vpop.f32.mrf.mxu0
    %218 = vdwg.mxu0
    %vm219 = vcmp.gt.f32.partialorder %v216, 0.0
    %v220 = vmul.f32 %v216, 0.01
    %v221 = vsel %vm219, %v216, %v220
    %223 = vrot.lane.b32.xlu0 %v221, 64
    %v224 = vpop.permute.xlu0 %223
    %vm226 = vcmask 1048064
    %227 = vst.msk [vmem:[#allocation2] sm:$0xff] %vm226, %v224
    %v228 = vld [vmem:[%s0 + $0x10] sm:$0xff]
    %v229 = vld [vmem:[%s0 + $0x18] sm:$0xff]
    %v230 = vld [vmem:[%s0 + $0x20] sm:$0xff]
    %234 = vrot.lane.b32.xlu0 %v228, 24
    %v235 = vpop.permute.xlu0 %234
    %236 = vrot.lane.b32.xlu0 %v229, 24
    %v237 = vpop.permute.xlu0 %236
    %238 = vrot.lane.b32.xlu0 %v230, 24
    %v239 = vpop.permute.xlu0 %238
    %vm240 = vcmask 195584
    %v241 = vsel %vm240, %v235, %v237
    %v242 = vsel %vm240, %v237, %v239
    %v244 = vsel %vm53, %v242, 0
    %246 = vmatprep.subr.mxu0 0.0
    %247 = vmatpush1.msra.mxu0 %v36
    %248 = vmatprep.subr.mxu0 0.0
    %249 = vmatpush1.msra.mxu0 %v35
    %250 = vmatprep.subr.mxu0 0.0
    %251 = vmatpush1.msra.mxu0 %v34
    %252 = vmatprep.subr.mxu0 0.0
    %253 = vmatpush1.msra.mxu0 %v33
    %254 = vmatprep.subr.mxu0 0.0
    %255 = vmatpush1.msra.mxu0 %v32
    %256 = vmatprep.subr.mxu0 0.0
    %257 = vmatpush1.msra.mxu0 %v31
    %258 = vmatprep.subr.mxu0 0.0
    %259 = vmatpush1.msra.mxu0 %v30
    %260 = vmatprep.subr.mxu0 0.0
    %261 = vmatpush1.msra.mxu0 %v29
    %262 = vmatprep.subr.mxu0 0.0
    %263 = vmatpush1.msra.mxu0 %v28
    %264 = vmatprep.subr.mxu0 0.0
    %265 = vmatpush1.msra.mxu0 %v27
    %266 = vmatprep.subr.mxu0 0.0
    %267 = vmatpush1.msra.mxu0 %v26
    %268 = vmatprep.subr.mxu0 0.0
    %269 = vmatpush1.msra.mxu0 %v25
    %270 = vmatprep.subr.mxu0 0.0
    %271 = vmatpush1.msra.mxu0 %v24
    %272 = vmatprep.subr.mxu0 0.0
    %273 = vmatpush1.msra.mxu0 %v23
    %274 = vmatprep.subr.mxu0 0.0
    %275 = vmatpush1.msra.mxu0 %v22
    %276 = vmatprep.subr.mxu0 0.0
    %277 = vmatpush1.msra.mxu0 %v21
    %278 = vmatprep.subr.mxu0 0.0
    %279 = vmatpush2.msra.mxu0 0.0
    %280 = vmatprep.subr.mxu0 0.0
    %281 = vmatpush2.msra.mxu0 0.0
    %282 = vmatprep.subr.mxu0 0.0
    %283 = vmatpush2.msra.mxu0 0.0
    %284 = vmatprep.subr.mxu0 0.0
    %285 = vmatpush2.msra.mxu0 0.0
    %286 = vmatprep.subr.mxu0 0.0
    %287 = vmatpush2.msra.mxu0 0.0
    %288 = vmatprep.subr.mxu0 0.0
    %289 = vmatpush2.msra.mxu0 0.0
    %290 = vmatprep.subr.mxu0 0.0
    %291 = vmatpush2.msra.mxu0 0.0
    %292 = vmatprep.subr.mxu0 0.0
    %293 = vmatpush2.msra.mxu0 0.0
    %294 = vmatprep.subr.mxu0 0.0
    %295 = vmatpush2.msra.mxu0 0.0
    %296 = vmatprep.subr.mxu0 0.0
    %297 = vmatpush2.msra.mxu0 %v59
    %298 = vmatprep.subr.mxu0 0.0
    %299 = vmatpush2.msra.mxu0 %v42
    %300 = vmatprep.subr.mxu0 0.0
    %301 = vmatpush2.msra.mxu0 %v41
    %302 = vmatprep.subr.mxu0 0.0
    %303 = vmatpush2.msra.mxu0 %v40
    %304 = vmatprep.subr.mxu0 0.0
    %305 = vmatpush2.msra.mxu0 %v39
    %306 = vmatprep.subr.mxu0 0.0
    %307 = vmatpush2.msra.mxu0 %v38
    %308 = vmatprep.subr.mxu0 0.0
    %309 = vmatpush2.msra.mxu0 %v37
    %310 = vmatprep.mubr.f32.mxu0 %v244
    %311 = vmatmul.mubr.f32.gmra.mxu0 %v241
    %v312 = vpop.f32.mrf.mxu0
    %v313 = vadd.f32 %v51, %v312
    %v314 = vpop.f32.mrf.mxu0
    %315 = vdwg.mxu0
    %vm316 = vcmp.gt.f32.partialorder %v313, 0.0
    %v317 = vmul.f32 %v313, 0.01
    %v318 = vsel %vm316, %v313, %v317
    %319 = vst.msk [vmem:[#allocation2 + $0x8] sm:$0xff] %vm134, %v318
    %v320 = vld [vmem:[%s0 + $0x20] sm:$0xff]
    %v321 = vld [vmem:[%s0 + $0x28] sm:$0xff]
    %324 = vrot.lane.b32.xlu0 %v320, 100
    %v325 = vpop.permute.xlu0 %324
    %326 = vrot.lane.b32.xlu0 %v321, 100
    %v327 = vpop.permute.xlu0 %326
    %vm328 = vcmask 818176
    %v329 = vsel %vm328, %v325, %v327
    %v331 = vsel %vm53, %v327, 0
    %333 = vmatprep.subr.mxu0 0.0
    %334 = vmatpush1.msra.mxu0 %v36
    %335 = vmatprep.subr.mxu0 0.0
    %336 = vmatpush1.msra.mxu0 %v35
    %337 = vmatprep.subr.mxu0 0.0
    %338 = vmatpush1.msra.mxu0 %v34
    %339 = vmatprep.subr.mxu0 0.0
    %340 = vmatpush1.msra.mxu0 %v33
    %341 = vmatprep.subr.mxu0 0.0
    %342 = vmatpush1.msra.mxu0 %v32
    %343 = vmatprep.subr.mxu0 0.0
    %344 = vmatpush1.msra.mxu0 %v31
    %345 = vmatprep.subr.mxu0 0.0
    %346 = vmatpush1.msra.mxu0 %v30
    %347 = vmatprep.subr.mxu0 0.0
    %348 = vmatpush1.msra.mxu0 %v29
    %349 = vmatprep.subr.mxu0 0.0
    %350 = vmatpush1.msra.mxu0 %v28
    %351 = vmatprep.subr.mxu0 0.0
    %352 = vmatpush1.msra.mxu0 %v27
    %353 = vmatprep.subr.mxu0 0.0
    %354 = vmatpush1.msra.mxu0 %v26
    %355 = vmatprep.subr.mxu0 0.0
    %356 = vmatpush1.msra.mxu0 %v25
    %357 = vmatprep.subr.mxu0 0.0
    %358 = vmatpush1.msra.mxu0 %v24
    %359 = vmatprep.subr.mxu0 0.0
    %360 = vmatpush1.msra.mxu0 %v23
    %361 = vmatprep.subr.mxu0 0.0
    %362 = vmatpush1.msra.mxu0 %v22
    %363 = vmatprep.subr.mxu0 0.0
    %364 = vmatpush1.msra.mxu0 %v21
    %365 = vmatprep.subr.mxu0 0.0
    %366 = vmatpush2.msra.mxu0 0.0
    %367 = vmatprep.subr.mxu0 0.0
    %368 = vmatpush2.msra.mxu0 0.0
    %369 = vmatprep.subr.mxu0 0.0
    %370 = vmatpush2.msra.mxu0 0.0
    %371 = vmatprep.subr.mxu0 0.0
    %372 = vmatpush2.msra.mxu0 0.0
    %373 = vmatprep.subr.mxu0 0.0
    %374 = vmatpush2.msra.mxu0 0.0
    %375 = vmatprep.subr.mxu0 0.0
    %376 = vmatpush2.msra.mxu0 0.0
    %377 = vmatprep.subr.mxu0 0.0
    %378 = vmatpush2.msra.mxu0 0.0
    %379 = vmatprep.subr.mxu0 0.0
    %380 = vmatpush2.msra.mxu0 0.0
    %381 = vmatprep.subr.mxu0 0.0
    %382 = vmatpush2.msra.mxu0 0.0
    %383 = vmatprep.subr.mxu0 0.0
    %384 = vmatpush2.msra.mxu0 %v59
    %385 = vmatprep.subr.mxu0 0.0
    %386 = vmatpush2.msra.mxu0 %v42
    %387 = vmatprep.subr.mxu0 0.0
    %388 = vmatpush2.msra.mxu0 %v41
    %389 = vmatprep.subr.mxu0 0.0
    %390 = vmatpush2.msra.mxu0 %v40
    %391 = vmatprep.subr.mxu0 0.0
    %392 = vmatpush2.msra.mxu0 %v39
    %393 = vmatprep.subr.mxu0 0.0
    %394 = vmatpush2.msra.mxu0 %v38
    %395 = vmatprep.subr.mxu0 0.0
    %396 = vmatpush2.msra.mxu0 %v37
    %397 = vmatprep.mubr.f32.mxu0 %v331
    %398 = vmatmul.mubr.f32.gmra.mxu0 %v329
    %v399 = vpop.f32.mrf.mxu0
    %v400 = vadd.f32 %v51, %v399
    %v401 = vpop.f32.mrf.mxu0
    %402 = vdwg.mxu0
    %vm403 = vcmp.gt.f32.partialorder %v400, 0.0
    %v404 = vmul.f32 %v400, 0.01
    %v405 = vsel %vm403, %v400, %v404
    %407 = vrot.lane.b32.xlu0 %v405, 64
    %v408 = vpop.permute.xlu0 %407
    %410 = vst.msk [vmem:[#allocation2 + $0x8] sm:$0xff] %vm226, %v408
    %v411 = vld [vmem:[#allocation2] sm:$0xff]
    %v412 = vld [vmem:[#allocation2 + $0x8] sm:$0xff]
    %v413 = vld [vmem:[%s3] sm:$0xff]
    %v414 = vld [vmem:[%s3 + $0x8] sm:$0xff]
    %v415 = vld [vmem:[%s3 + $0x10] sm:$0xff]
    %v416 = vld [vmem:[%s3 + $0x18] sm:$0xff]
    %v417 = vld [vmem:[%s3 + $0x20] sm:$0xff]
    %v418 = vld [vmem:[%s3 + $0x28] sm:$0xff]
    %v419 = vld [vmem:[%s3 + $0x30] sm:$0xff]
    %v420 = vld [vmem:[%s3 + $0x38] sm:$0xff]
    %v421 = vld [vmem:[%s3 + $0x40] sm:$0xff]
    %v422 = vld [vmem:[%s3 + $0x48] sm:$0xff]
    %v423 = vld [vmem:[%s3 + $0x50] sm:$0xff]
    %v424 = vld [vmem:[%s3 + $0x58] sm:$0xff]
    %v425 = vld [vmem:[%s3 + $0x60] sm:$0xff]
    %v426 = vld [vmem:[%s3 + $0x68] sm:$0xff]
    %v427 = vld [vmem:[%s3 + $0x70] sm:$0xff]
    %v428 = vld [vmem:[%s3 + $0x78] sm:$0xff]
    %v429 = vld [vmem:[%s3 + $0x80] sm:$0xff]
    %v430 = vld [vmem:[%s3 + $0x88] sm:$0xff]
    %v431 = vld [vmem:[%s3 + $0x90] sm:$0xff]
    %v432 = vld [vmem:[%s3 + $0x98] sm:$0xff]
    %v433 = vld [vmem:[%s3 + $0xa0] sm:$0xff]
    %v434 = vld [vmem:[%s3 + $0xa8] sm:$0xff]
    %v435 = vld [vmem:[%s3 + $0xb0] sm:$0xff]
    %v436 = vld [vmem:[%s3 + $0xb8] sm:$0xff]
    %v437 = vld [vmem:[%s3 + $0xc0] sm:$0xff]
    %v438 = vld [vmem:[%s3 + $0xc8] sm:$0xff]
    %v439 = vld [vmem:[%s3 + $0xd0] sm:$0xff]
    %v440 = vld [vmem:[%s3 + $0xd8] sm:$0xff]
    %v441 = vld [vmem:[%s3 + $0xe0] sm:$0xff]
    %v442 = vld [vmem:[%s3 + $0xe8] sm:$0xff]
    %v443 = vld [vmem:[%s3 + $0xf0] sm:$0xff]
    %v444 = vld [vmem:[%s3 + $0xf8] sm:$0xff]
    %v445 = vld [vmem:[%s4] sm:$0x1]
    %v447 = vlaneseq
    %v448 = vshrl.u32 %v447, 7
    %v449 = vsub.s32 0, %v448
    %v450 = vrot.slane %v445, %v449
    %452 = vmatprep.subr.mxu0 0.0
    %453 = vmatpush1.msra.mxu0 %v428
    %454 = vmatprep.subr.mxu0 0.0
    %455 = vmatpush1.msra.mxu0 %v427
    %456 = vmatprep.subr.mxu0 0.0
    %457 = vmatpush1.msra.mxu0 %v426
    %458 = vmatprep.subr.mxu0 0.0
    %459 = vmatpush1.msra.mxu0 %v425
    %460 = vmatprep.subr.mxu0 0.0
    %461 = vmatpush1.msra.mxu0 %v424
    %462 = vmatprep.subr.mxu0 0.0
    %463 = vmatpush1.msra.mxu0 %v423
    %464 = vmatprep.subr.mxu0 0.0
    %465 = vmatpush1.msra.mxu0 %v422
    %466 = vmatprep.subr.mxu0 0.0
    %467 = vmatpush1.msra.mxu0 %v421
    %468 = vmatprep.subr.mxu0 0.0
    %469 = vmatpush1.msra.mxu0 %v420
    %470 = vmatprep.subr.mxu0 0.0
    %471 = vmatpush1.msra.mxu0 %v419
    %472 = vmatprep.subr.mxu0 0.0
    %473 = vmatpush1.msra.mxu0 %v418
    %474 = vmatprep.subr.mxu0 0.0
    %475 = vmatpush1.msra.mxu0 %v417
    %476 = vmatprep.subr.mxu0 0.0
    %477 = vmatpush1.msra.mxu0 %v416
    %478 = vmatprep.subr.mxu0 0.0
    %479 = vmatpush1.msra.mxu0 %v415
    %480 = vmatprep.subr.mxu0 0.0
    %481 = vmatpush1.msra.mxu0 %v414
    %482 = vmatprep.subr.mxu0 0.0
    %483 = vmatpush1.msra.mxu0 %v413
    %484 = vmatprep.subr.mxu0 0.0
    %485 = vmatpush2.msra.mxu0 %v444
    %486 = vmatprep.subr.mxu0 0.0
    %487 = vmatpush2.msra.mxu0 %v443
    %488 = vmatprep.subr.mxu0 0.0
    %489 = vmatpush2.msra.mxu0 %v442
    %490 = vmatprep.subr.mxu0 0.0
    %491 = vmatpush2.msra.mxu0 %v441
    %492 = vmatprep.subr.mxu0 0.0
    %493 = vmatpush2.msra.mxu0 %v440
    %494 = vmatprep.subr.mxu0 0.0
    %495 = vmatpush2.msra.mxu0 %v439
    %496 = vmatprep.subr.mxu0 0.0
    %497 = vmatpush2.msra.mxu0 %v438
    %498 = vmatprep.subr.mxu0 0.0
    %499 = vmatpush2.msra.mxu0 %v437
    %500 = vmatprep.subr.mxu0 0.0
    %501 = vmatpush2.msra.mxu0 %v436
    %502 = vmatprep.subr.mxu0 0.0
    %503 = vmatpush2.msra.mxu0 %v435
    %504 = vmatprep.subr.mxu0 0.0
    %505 = vmatpush2.msra.mxu0 %v434
    %506 = vmatprep.subr.mxu0 0.0
    %507 = vmatpush2.msra.mxu0 %v433
    %508 = vmatprep.subr.mxu0 0.0
    %509 = vmatpush2.msra.mxu0 %v432
    %510 = vmatprep.subr.mxu0 0.0
    %511 = vmatpush2.msra.mxu0 %v431
    %512 = vmatprep.subr.mxu0 0.0
    %513 = vmatpush2.msra.mxu0 %v430
    %514 = vmatprep.subr.mxu0 0.0
    %515 = vmatpush2.msra.mxu0 %v429
    %516 = vmatprep.mubr.f32.mxu0 %v412
    %517 = vmatmul.mubr.f32.gmra.mxu0 %v411
    %v518 = vpop.f32.mrf.mxu0
    %v519 = vadd.f32 %v450, %v518
    %v520 = vpop.f32.mrf.mxu0
    %521 = vdwg.mxu0
    %522 = vst [vmem:[#allocation3] sm:$0xff] %v519
    // Predicated region
    $region22: #{tpu_custom_call.1} parent=1 // pred_check
      _
    $region23: #{tpu_custom_call.1} parent=1 // pred_check_branch
      %524 = sbr.rel (0) target = $region25
    $region24: #{tpu_custom_call.1} parent=1 // pred_region
      %s526 = ssub.s32 128, 128
      %527 = vsyncadd [#allocation4], %s526
      %s529 = sshll.u32 [#allocation3], 4
      %s530 = int_to_ptr.vmem [resolvable:$true] %s529
      %532 = dma.vmem_to_hbm [thread:$0]  %s530, 128, %s5, [#allocation4]
    $region25: #{tpu_custom_call.1} parent=1 // pred_fallthru
      _
    // Predicated region
    $region26: #{tpu_custom_call.1} parent=1 // pred_check
      _
    $region27: #{tpu_custom_call.1} parent=1 // pred_check_branch
      %534 = sbr.rel (0) target = $region29
    $region28: #{tpu_custom_call.1} parent=1 // pred_region
      %535 = dma.done [#allocation4], 128
    $region29: #{tpu_custom_call.1} parent=1 // pred_fallthru
      _
    %536 = vsyncpa [#allocation4], 1

</llo_original>
